<compile_context>
chip_gen: v7x
topology: tpu7x:2x2x1
jax: 0.10.0
libtpu: 0.0.40
codegen_flags: <defaults>
</compile_context>

<pallas_src>
import functools
import math

import jax
import jax.numpy as jnp
from jax import lax
from jax.experimental import pallas as pl
from jax.experimental.pallas import tpu as pltpu


def _round_up(x: int, m: int) -> int:
    return (x + m - 1) // m * m


def _cdiv(a: int, b: int) -> int:
    return -(-a // b)


def _rowgroup_sum(x, tm: int, tn: int):
    """Sum a (tm, tn) tile over 8-row groups -> (8, tn).

    Balanced tree of whole-vreg adds (slices are sublane-aligned, full lane
    width), so this is pure VPU work with no cross-lane / XLU reduce.
    """
    parts = [x[r * 8:(r + 1) * 8, :] for r in range(tm // 8)]
    while len(parts) > 1:
        nxt = []
        for idx in range(0, len(parts) - 1, 2):
            nxt.append(parts[idx] + parts[idx + 1])
        if len(parts) % 2:
            nxt.append(parts[-1])
        parts = nxt
    return parts[0]


def _shared_special_loss_kernel(a_ref, b_ref, inv_a_ref, inv_b_ref, out_ref,
                                *scratch, tm, tn, multi_k):
    j = pl.program_id(1)
    k = pl.program_id(2)

    # The (8, tn) output block for row-tile i is VMEM-resident across the
    # whole (j, k) reduction: zero it once.
    @pl.when((j == 0) & (k == 0))
    def _():
        out_ref[...] = jnp.zeros_like(out_ref)

    def finalize(g):
        # Precomputed inverse row norms: (tm, 1) sublane broadcast and
        # (1, tn) lane broadcast, applied post-matmul.
        sims = g * inv_a_ref[...] * inv_b_ref[...]
        sims = jnp.clip(sims, 0.0005, 0.9995)
        neg_log = -jnp.log(1.0 - sims)                     # EUP transcendental
        out_ref[...] = out_ref[...] + _rowgroup_sum(neg_log, tm, tn)

    if multi_k:
        acc_ref, = scratch

        @pl.when(k == 0)
        def _():
            acc_ref[...] = jnp.zeros_like(acc_ref)

        # (tm, tk) x (tn, tk), contracting dim 1 with dim 1 -> (tm, tn), f32
        # accumulation.  No explicit .T (no XLU vxpose / VMEM duplicate).
        acc_ref[...] += lax.dot_general(
            a_ref[...], b_ref[...], (((1,), (1,)), ((), ())),
            preferred_element_type=jnp.float32)

        @pl.when(k == pl.num_programs(2) - 1)
        def _():
            finalize(acc_ref[...])
    else:
        finalize(lax.dot_general(
            a_ref[...], b_ref[...], (((1,), (1,)), ((), ())),
            preferred_element_type=jnp.float32))


def shared_special_loss(embedded_a: jax.Array,
                        embedded_b: jax.Array,
                        *,
                        tile_m: int = 1024,
                        tile_n: int = 512,
                        tile_k: int = 1024) -> jax.Array:
    """Pallas implementation of SharedSpecialLoss.forward. Returns scalar f32.

    Defaults use large tiles on every generation (the kernel is HBM-bound at
    small tiles); tiles shrink automatically to a generation-aware VMEM
    budget, so there is no need to pass smaller tiles per chip.
    """
    bs_a, d = embedded_a.shape
    bs_b, d_b = embedded_b.shape
    assert d == d_b, "feature dims must match"

    itemsize = jnp.dtype(embedded_a.dtype).itemsize

    # ---- K tiling (feature axis, lane dense) --------------------------------
    d_pad128 = _round_up(d, 128)
    tk = max(128, (min(tile_k, d_pad128) // 128) * 128)
    if tk >= d_pad128:
        tk = d_pad128
        d_pad = d_pad128
    else:
        d_pad = _round_up(d, tk)
    n_k = d_pad // tk

    # ---- Row tiles -----------------------------------------------------------
    tm = min(tile_m, _round_up(bs_a, 8))
    tm = _round_up(tm, 8)
    # v7x dual-TC: make sure the "parallel" i axis has >= 2 tiles when the
    # batch is big enough to split.
    if _round_up(bs_a, tm) // tm < 2 and bs_a >= 16:
        tm = _round_up(_cdiv(bs_a, 2), 8)
    tn = min(tile_n, _round_up(bs_b, 128))
    tn = _round_up(tn, 128)

    # ---- Generation-aware VMEM budget & graceful tile shrink -----------------
    try:
        cap = int(getattr(pltpu.get_tpu_info(), "vmem_capacity_bytes",
                          64 << 20))
    except Exception:  # pragma: no cover - e.g. interpret mode
        cap = 64 << 20
    budget = max(min(cap - (16 << 20), 100 << 20), 24 << 20)

    def vmem_need(tm_, tn_, tk_, nk_):
        a_buf = 2 * tm_ * tk_ * itemsize          # double-buffered A slab
        b_buf = 2 * tn_ * tk_ * itemsize          # double-buffered B slab
        acc = tm_ * tn_ * 4 if nk_ > 1 else 0     # f32 K accumulator
        out = 2 * 8 * tn_ * 4                     # output partial block
        inv = 2 * (tm_ + tn_) * 4                 # norm blocks
        return a_buf + b_buf + acc + out + inv + (1 << 20)

    while vmem_need(tm, tn, tk, n_k) > budget:
        if tm > 256:
            tm = max(256, _round_up(tm // 2, 8))
        elif tn > 256:
            tn = max(256, _round_up(tn // 2, 128))
        elif tk > 256:
            tk = max(256, (tk // 2 // 128) * 128)
            d_pad = _round_up(d, tk)
            n_k = d_pad // tk
        else:
            break

    bs_a_pad = _round_up(bs_a, tm)
    bs_b_pad = _round_up(bs_b, tn)
    n_i = bs_a_pad // tm
    n_j = bs_b_pad // tn
    multi_k = n_k > 1

    # ---- Pad inputs & precompute inverse row norms (once, in XLA) ------------
    a_p = jnp.pad(embedded_a, ((0, bs_a_pad - bs_a), (0, d_pad - d)))
    b_p = jnp.pad(embedded_b, ((0, bs_b_pad - bs_b), (0, d_pad - d)))

    a32 = a_p.astype(jnp.float32)
    b32 = b_p.astype(jnp.float32)
    # F.normalize(dim=1, eps=1e-12): x / max(||x||, 1e-12).
    inv_a = 1.0 / jnp.maximum(
        jnp.sqrt(jnp.sum(a32 * a32, axis=1, keepdims=True)), 1e-12)   # (Ma, 1)
    inv_b = (1.0 / jnp.maximum(
        jnp.sqrt(jnp.sum(b32 * b32, axis=1, keepdims=True)), 1e-12)).T  # (1, Mb)

    # ---- Cost estimate (A fetched once when n_k == 1; B re-read n_i times) ---
    a_bytes = bs_a_pad * d_pad * itemsize * (n_j if multi_k else 1)
    b_bytes = n_i * bs_b_pad * d_pad * itemsize
    cost = pl.CostEstimate(
        flops=int(2 * bs_a_pad * bs_b_pad * d_pad),
        transcendentals=int(bs_a_pad * bs_b_pad),
        bytes_accessed=int(a_bytes + b_bytes
                           + (bs_a_pad + bs_b_pad) * 4
                           + n_i * 8 * tn * 4),
    )

    need_bytes = vmem_need(tm, tn, tk, n_k)
    vmem_limit = int(min(cap - (8 << 20), max(need_bytes + (8 << 20), 32 << 20)))

    kernel = functools.partial(_shared_special_loss_kernel,
                               tm=tm, tn=tn, multi_k=multi_k)
    scratch_shapes = ([pltpu.VMEM((tm, tn), jnp.float32)] if multi_k else [])

    partials = pl.pallas_call(
        kernel,
        out_shape=jax.ShapeDtypeStruct((n_i * 8, tn), jnp.float32),
        grid_spec=pltpu.PrefetchScalarGridSpec(
            num_scalar_prefetch=0,
            grid=(n_i, n_j, n_k),
            in_specs=[
                pl.BlockSpec((tm, tk), lambda i, j, k: (i, k)),
                pl.BlockSpec((tn, tk), lambda i, j, k: (j, k)),
                pl.BlockSpec((tm, 1), lambda i, j, k: (i, 0)),
                pl.BlockSpec((1, tn), lambda i, j, k: (0, j)),
            ],
            out_specs=pl.BlockSpec((8, tn), lambda i, j, k: (i, 0)),
            scratch_shapes=scratch_shapes,
        ),
        compiler_params=pltpu.CompilerParams(
            dimension_semantics=("parallel", "arbitrary", "arbitrary"),
            vmem_limit_bytes=vmem_limit,
        ),
        cost_estimate=cost,
    )(a_p, b_p, inv_a, inv_b)

    # Wrapper-side reduction over the per-row-tile partials, then remove the
    # constant contribution of padded pairs (each padded pair has sims == 0
    # -> clamped to 0.0005 -> contributes exactly -log(0.9995)).
    total = jnp.sum(partials)
    pad_pairs = bs_a_pad * bs_b_pad - bs_a * bs_b
    if pad_pairs:
        total = total - jnp.float32(pad_pairs * (-math.log(1.0 - 0.0005)))
    return total / jnp.float32(bs_a * bs_b)


def _reference_loss(a, b):
    # Pure-JAX reference mirroring the PyTorch module.
    a = a.astype(jnp.float32)
    b = b.astype(jnp.float32)
    a_n = a / jnp.maximum(
        jnp.sqrt(jnp.sum(a * a, axis=1, keepdims=True)), 1e-12)
    b_n = b / jnp.maximum(
        jnp.sqrt(jnp.sum(b * b, axis=1, keepdims=True)), 1e-12)
    sims = jnp.clip(a_n @ b_n.T, 0.0005, 0.9995)
    return jnp.mean(-jnp.log(1.0 - sims))


if __name__ == "__main__":
    key = jax.random.PRNGKey(0)
    k1, k2, k3, k4, k5, k6 = jax.random.split(key, 6)

    # Case 1: tiny, single tile on every grid axis.
    a1 = jax.random.normal(k1, (8, 32), dtype=jnp.float32)
    b1 = jax.random.normal(k2, (8, 32), dtype=jnp.float32)
    loss1 = shared_special_loss(a1, b1)
    jax.block_until_ready(loss1)
    ref1 = _reference_loss(a1, b1)
    assert jnp.allclose(loss1, ref1, atol=1e-4, rtol=1e-4), (loss1, ref1)

    # Case 2: multi i-tile grid (dual-TC split heuristic) plus padded
    # rows/cols handled via the constant-correction path.
    a2 = jax.random.normal(k3, (40, 32), dtype=jnp.float32)
    b2 = jax.random.normal(k4, (24, 32), dtype=jnp.float32)
    loss2 = shared_special_loss(a2, b2)
    jax.block_until_ready(loss2)
    ref2 = _reference_loss(a2, b2)
    assert jnp.allclose(loss2, ref2, atol=1e-4, rtol=1e-4), (loss2, ref2)

    # Case 3: forces the K-tiled path (n_k > 1) and a multi-j grid.
    a3 = jax.random.normal(k5, (72, 200), dtype=jnp.float32)
    b3 = jax.random.normal(k6, (136, 200), dtype=jnp.float32)
    loss3 = shared_special_loss(a3, b3, tile_n=128, tile_k=128)
    jax.block_until_ready(loss3)
    ref3 = _reference_loss(a3, b3)
    assert jnp.allclose(loss3, ref3, atol=1e-4, rtol=1e-4), (loss3, ref3)

    print("KERNEL_OK")
</pallas_src>

<mosaic_0001>
module attributes {stable_mosaic.version = 11 : i64} {
  func.func @_shared_special_loss_kernel(%arg0: i32, %arg1: i32, %arg2: i32, %arg3: memref<8x128xf32, #tpu.memory_space<vmem>>, %arg4: memref<128x128xf32, #tpu.memory_space<vmem>>, %arg5: memref<8x1xf32, #tpu.memory_space<vmem>>, %arg6: memref<1x128xf32, #tpu.memory_space<vmem>>, %arg7: memref<8x128xf32, #tpu.memory_space<vmem>>) attributes {dimension_semantics = [#tpu.dimension_semantics<parallel>, #tpu.dimension_semantics<arbitrary>, #tpu.dimension_semantics<arbitrary>], iteration_bounds = array<i64: 1, 1, 1>, scalar_prefetch = 0 : i64, scratch_operands = 0 : i64, tpu.core_type = #tpu.core_type<tc>, window_params = [{transform_indices = @transform_0, window_bounds = array<i64: 8, 128>}, {transform_indices = @transform_1, window_bounds = array<i64: 128, 128>}, {transform_indices = @transform_2, window_bounds = array<i64: 8, 1>}, {transform_indices = @transform_3, window_bounds = array<i64: 1, 128>}, {transform_indices = @transform_4, window_bounds = array<i64: 8, 128>}]} {
    %c0_i32 = arith.constant 0 : i32
    %0 = arith.cmpi eq, %arg1, %c0_i32 : i32
    %c0_i32_0 = arith.constant 0 : i32
    %1 = arith.cmpi eq, %arg2, %c0_i32_0 : i32
    %2 = arith.andi %0, %1 : i1
    %3 = arith.extui %2 : i1 to i32
    %c0_i32_1 = arith.constant 0 : i32
    %4 = arith.cmpi ne, %3, %c0_i32_1 : i32
    scf.if %4 {
      %cst_17 = arith.constant 0.000000e+00 : f32
      %26 = vector.broadcast %cst_17 : f32 to vector<8x128xf32>
      %c0_18 = arith.constant 0 : index
      %c0_19 = arith.constant 0 : index
      %27 = vector.load %arg7[%c0_18, %c0_19] : memref<8x128xf32, #tpu.memory_space<vmem>>, vector<8x128xf32>
      tpu.vector_store %arg7[%c0_18, %c0_19], %26 {strides = array<i32>} : memref<8x128xf32, #tpu.memory_space<vmem>>, vector<8x128xf32>,
    } else {
    }
    %c0 = arith.constant 0 : index
    %c0_2 = arith.constant 0 : index
    %5 = vector.load %arg3[%c0, %c0_2] : memref<8x128xf32, #tpu.memory_space<vmem>>, vector<8x128xf32>
    %c0_3 = arith.constant 0 : index
    %c0_4 = arith.constant 0 : index
    %6 = vector.load %arg4[%c0_3, %c0_4] : memref<128x128xf32, #tpu.memory_space<vmem>>, vector<128x128xf32>
    %cst = arith.constant dense<0.000000e+00> : vector<8x128xf32>
    %7 = tpu.matmul %5, %6, %cst {dimension_numbers = #tpu.dot_dimension_numbers<[1], [1], [0], [0], [0, 0, 1, 0], [], []>} : vector<8x128xf32>, vector<128x128xf32>, vector<8x128xf32> -> vector<8x128xf32>
    %c0_5 = arith.constant 0 : index
    %c0_6 = arith.constant 0 : index
    %8 = vector.load %arg5[%c0_5, %c0_6] : memref<8x1xf32, #tpu.memory_space<vmem>>, vector<8x1xf32>
    %9 = vector.broadcast %8 : vector<8x1xf32> to vector<8x128xf32>
    %10 = arith.mulf %7, %9 : vector<8x128xf32>
    %c0_7 = arith.constant 0 : index
    %c0_8 = arith.constant 0 : index
    %11 = vector.load %arg6[%c0_7, %c0_8] : memref<1x128xf32, #tpu.memory_space<vmem>>, vector<1x128xf32>
    %12 = vector.broadcast %11 : vector<1x128xf32> to vector<8x128xf32>
    %13 = arith.mulf %10, %12 : vector<8x128xf32>
    %cst_9 = arith.constant 5.000000e-04 : f32
    %cst_10 = arith.constant 0.999499976 : f32
    %14 = vector.broadcast %cst_9 : f32 to vector<8x128xf32>
    %15 = arith.maximumf %14, %13 : vector<8x128xf32>
    %16 = vector.broadcast %cst_10 : f32 to vector<8x128xf32>
    %17 = arith.minimumf %16, %15 : vector<8x128xf32>
    %cst_11 = arith.constant 1.000000e+00 : f32
    %18 = vector.broadcast %cst_11 : f32 to vector<8x128xf32>
    %19 = arith.subf %18, %17 : vector<8x128xf32>
    %20 = math.log %19 : vector<8x128xf32>
    %cst_12 = arith.constant 0.000000e+00 : f32
    %21 = vector.broadcast %cst_12 : f32 to vector<8x128xf32>
    %22 = arith.subf %21, %20 : vector<8x128xf32>
    %c0_13 = arith.constant 0 : index
    %c0_14 = arith.constant 0 : index
    %23 = vector.load %arg7[%c0_13, %c0_14] : memref<8x128xf32, #tpu.memory_space<vmem>>, vector<8x128xf32>
    %24 = arith.addf %23, %22 : vector<8x128xf32>
    %c0_15 = arith.constant 0 : index
    %c0_16 = arith.constant 0 : index
    %25 = vector.load %arg7[%c0_15, %c0_16] : memref<8x128xf32, #tpu.memory_space<vmem>>, vector<8x128xf32>
    tpu.vector_store %arg7[%c0_15, %c0_16], %24 {strides = array<i32>} : memref<8x128xf32, #tpu.memory_space<vmem>>, vector<8x128xf32>,
    return
  }
  func.func @transform_0(%arg0: i32, %arg1: i32, %arg2: i32) -> (i32, i32) {
    %c0_i32 = arith.constant 0 : i32
    return %arg0, %arg2 : i32, i32
  }
  func.func @transform_1(%arg0: i32, %arg1: i32, %arg2: i32) -> (i32, i32) {
    %c0_i32 = arith.constant 0 : i32
    return %arg1, %arg2 : i32, i32
  }
  func.func @transform_2(%arg0: i32, %arg1: i32, %arg2: i32) -> (i32, i32) {
    %c0_i32 = arith.constant 0 : i32
    %c0_i32_0 = arith.constant 0 : i32
    return %arg0, %c0_i32 : i32, i32
  }
  func.func @transform_3(%arg0: i32, %arg1: i32, %arg2: i32) -> (i32, i32) {
    %c0_i32 = arith.constant 0 : i32
    %c0_i32_0 = arith.constant 0 : i32
    return %c0_i32, %arg1 : i32, i32
  }
  func.func @transform_4(%arg0: i32, %arg1: i32, %arg2: i32) -> (i32, i32) {
    %c0_i32 = arith.constant 0 : i32
    %c0_i32_0 = arith.constant 0 : i32
    return %arg0, %c0_i32 : i32, i32
  }
}

</mosaic_0001>

<llo_original>
// kernel: tpu_custom_call.1
$region0: #{tpu_custom_call.1}
  #allocation0 [shape = 'u32[]', space=smem, size = 0x4, offset = 0x4, fixed_abs, tag = 'smem constant byte address 0x4 - core index']
  #allocation1 [shape = 'u32[144,128]{1,0:T(1,128)}', space=vmem, size = 0x12000, scoped, tag = 'internal scratch']
  %s0 = inlined_call_operand.vmem [shape: f32[8,128], index: 0, kind: input, shape index: {}]
  %s1 = inlined_call_operand.hbm [shape: f32[128,128], index: 1, kind: input, shape index: {}]
  %s2 = inlined_call_operand.vmem [shape: f32[8,1], index: 2, kind: input, shape index: {}]
  %s3 = inlined_call_operand.vmem [shape: f32[1,128], index: 3, kind: input, shape index: {}]
  %s4 = inlined_call_operand.hbm [shape: f32[8,128], index: 4, kind: output, shape index: {}]
  %s5 = sld [smem:[#allocation0]]
  $region34: #{tpu_custom_call.1} parent=0
    _
  %s7 = ssub.s32 1, %s5
  %s8 = scalar_select 0, %s7, %s5
  $region1: #{tpu_custom_call.1} parent=0
    #allocation2 [shape = 'u8[65536]{0}', space=vmem, size = 0x10000, scoped, tag = 'input window, operand 1, single buffered']
    #allocation3 [shape = 's32[1]{0}', space=sflag, size = 0x4, scoped, tag = 'scoped memory for tpu_custom_call.1']
    #allocation4 [shape = 's32[1]{0}', space=sflag, size = 0x4, scoped, tag = 'scoped memory for tpu_custom_call.1']
    #allocation5 [shape = 'u8[4096]{0}', space=vmem, size = 0x1000, scoped, tag = 'output window, operand 0, single buffered']
    %9 = vsyncpa [#allocation3], 0
    %10 = vsyncpa [#allocation4], 0
    // Predicated region
    $region2: #{tpu_custom_call.1} parent=1 // pred_check
      _
    $region3: #{tpu_custom_call.1} parent=1 // pred_check_branch
      %12 = sbr.rel (0) target = $region5
    $region4: #{tpu_custom_call.1} parent=1 // pred_region
      _
    $region5: #{tpu_custom_call.1} parent=1 // pred_fallthru
      _
    // Predicated region
    $region6: #{tpu_custom_call.1} parent=1 // pred_check
      _
    $region7: #{tpu_custom_call.1} parent=1 // pred_check_branch
      %14 = sbr.rel (0) target = $region9
    $region8: #{tpu_custom_call.1} parent=1 // pred_region
      %s16 = ssub.s32 2048, 2048
      %17 = vsyncadd [#allocation3], %s16
      %s18 = sshll.u32 [#allocation2], 4
      %s19 = int_to_ptr.vmem [resolvable:$true] %s18
      %24 = dma.hbm_to_vmem [thread:$0]  %s1, 2048, %s19, [#allocation3], 128, 128, 8
    $region9: #{tpu_custom_call.1} parent=1 // pred_fallthru
      _
    // Predicated region
    $region10: #{tpu_custom_call.1} parent=1 // pred_check
      _
    $region11: #{tpu_custom_call.1} parent=1 // pred_check_branch
      %26 = sbr.rel (0) target = $region13
    $region12: #{tpu_custom_call.1} parent=1 // pred_region
      _
    $region13: #{tpu_custom_call.1} parent=1 // pred_fallthru
      _
    // Predicated region
    $region14: #{tpu_custom_call.1} parent=1 // pred_check
      _
    $region15: #{tpu_custom_call.1} parent=1 // pred_check_branch
      %28 = sbr.rel (0) target = $region17
    $region16: #{tpu_custom_call.1} parent=1 // pred_region
      _
    $region17: #{tpu_custom_call.1} parent=1 // pred_fallthru
      _
    // Predicated region
    $region18: #{tpu_custom_call.1} parent=1 // pred_check
      _
    $region19: #{tpu_custom_call.1} parent=1 // pred_check_branch
      %30 = sbr.rel (0) target = $region21
    $region20: #{tpu_custom_call.1} parent=1 // pred_region
      %31 = dma.done [#allocation3], 2048
    $region21: #{tpu_custom_call.1} parent=1 // pred_fallthru
      _
    %p32 = scmp.eq.s32.totalorder 0, 0
    %p33 = scmp.eq.s32.totalorder 0, 0
    %p34 = pnand %p32, %p33
    %p35 = pneg %p34
    // Predicated region
    $region22: #{tpu_custom_call.1} parent=1 // pred_check
      _
    $region23: #{tpu_custom_call.1} parent=1 // pred_check_branch
      %37 = sbr.rel (%p34) target = $region25
    $region24: #{tpu_custom_call.1} parent=1 // pred_region
      %38 = vst [vmem:[#allocation5] sm:$0xff] 0.0
    $region25: #{tpu_custom_call.1} parent=1 // pred_fallthru
      _
    %v39 = vld [vmem:[%s0] sm:$0xff]
    %v40 = vld [vmem:[#allocation2] sm:$0xff]
    %v41 = vld [vmem:[#allocation2 + $0x8] sm:$0xff]
    %v42 = vld [vmem:[#allocation2 + $0x10] sm:$0xff]
    %v43 = vld [vmem:[#allocation2 + $0x18] sm:$0xff]
    %v44 = vld [vmem:[#allocation2 + $0x20] sm:$0xff]
    %v45 = vld [vmem:[#allocation2 + $0x28] sm:$0xff]
    %v46 = vld [vmem:[#allocation2 + $0x30] sm:$0xff]
    %v47 = vld [vmem:[#allocation2 + $0x38] sm:$0xff]
    %v48 = vld [vmem:[#allocation2 + $0x40] sm:$0xff]
    %v49 = vld [vmem:[#allocation2 + $0x48] sm:$0xff]
    %v50 = vld [vmem:[#allocation2 + $0x50] sm:$0xff]
    %v51 = vld [vmem:[#allocation2 + $0x58] sm:$0xff]
    %v52 = vld [vmem:[#allocation2 + $0x60] sm:$0xff]
    %v53 = vld [vmem:[#allocation2 + $0x68] sm:$0xff]
    %v54 = vld [vmem:[#allocation2 + $0x70] sm:$0xff]
    %v55 = vld [vmem:[#allocation2 + $0x78] sm:$0xff]
    %56 = vmatprep.subr.mxu0 0.0
    %57 = vmatpush1.xpose.msra.mxu0 %v40
    %58 = vmatprep.subr.mxu0 0.0
    %59 = vmatpush1.xpose.msra.mxu0 %v41
    %60 = vmatprep.subr.mxu0 0.0
    %61 = vmatpush1.xpose.msra.mxu0 %v42
    %62 = vmatprep.subr.mxu0 0.0
    %63 = vmatpush1.xpose.msra.mxu0 %v43
    %64 = vmatprep.subr.mxu0 0.0
    %65 = vmatpush1.xpose.msra.mxu0 %v44
    %66 = vmatprep.subr.mxu0 0.0
    %67 = vmatpush1.xpose.msra.mxu0 %v45
    %68 = vmatprep.subr.mxu0 0.0
    %69 = vmatpush1.xpose.msra.mxu0 %v46
    %70 = vmatprep.subr.mxu0 0.0
    %71 = vmatpush1.xpose.msra.mxu0 %v47
    %72 = vmatprep.subr.mxu0 0.0
    %73 = vmatpush1.xpose.msra.mxu0 %v48
    %74 = vmatprep.subr.mxu0 0.0
    %75 = vmatpush1.xpose.msra.mxu0 %v49
    %76 = vmatprep.subr.mxu0 0.0
    %77 = vmatpush1.xpose.msra.mxu0 %v50
    %78 = vmatprep.subr.mxu0 0.0
    %79 = vmatpush1.xpose.msra.mxu0 %v51
    %80 = vmatprep.subr.mxu0 0.0
    %81 = vmatpush1.xpose.msra.mxu0 %v52
    %82 = vmatprep.subr.mxu0 0.0
    %83 = vmatpush1.xpose.msra.mxu0 %v53
    %84 = vmatprep.subr.mxu0 0.0
    %85 = vmatpush1.xpose.msra.mxu0 %v54
    %86 = vmatprep.subr.mxu0 0.0
    %87 = vmatpush1.xpose.msra.mxu0 %v55
    %88 = vmatprep.subr.mxu0 0.0
    %89 = vmatpush1.xpose.msra.mxu0 0.0
    %90 = vmatprep.subr.mxu0 0.0
    %91 = vmatpush1.xpose.msra.mxu0 0.0
    %92 = vmatprep.subr.mxu0 0.0
    %93 = vmatpush1.xpose.msra.mxu0 0.0
    %94 = vmatprep.subr.mxu0 0.0
    %95 = vmatpush1.xpose.msra.mxu0 0.0
    %96 = vmatprep.subr.mxu0 0.0
    %97 = vmatpush1.xpose.msra.mxu0 0.0
    %98 = vmatprep.subr.mxu0 0.0
    %99 = vmatpush1.xpose.msra.mxu0 0.0
    %100 = vmatprep.subr.mxu0 0.0
    %101 = vmatpush1.xpose.msra.mxu0 0.0
    %102 = vmatprep.subr.mxu0 0.0
    %103 = vmatpush1.xpose.msra.mxu0 0.0
    %104 = vmatprep.subr.mxu0 0.0
    %105 = vmatpush1.xpose.msra.mxu0 0.0
    %106 = vmatprep.subr.mxu0 0.0
    %107 = vmatpush1.xpose.msra.mxu0 0.0
    %108 = vmatprep.subr.mxu0 0.0
    %109 = vmatpush1.xpose.msra.mxu0 0.0
    %110 = vmatprep.subr.mxu0 0.0
    %111 = vmatpush1.xpose.msra.mxu0 0.0
    %112 = vmatprep.subr.mxu0 0.0
    %113 = vmatpush1.xpose.msra.mxu0 0.0
    %114 = vmatprep.subr.mxu0 0.0
    %115 = vmatpush1.xpose.msra.mxu0 0.0
    %116 = vmatprep.subr.mxu0 0.0
    %117 = vmatpush1.xpose.msra.mxu0 0.0
    %118 = vmatprep.subr.mxu0 0.0
    %119 = vmatpush1.xpose.msra.mxu0 0.0
    %120 = vmatprep.mubr.f32.mxu0 0.0
    %121 = vmatmul.mubr.f32.gmra.mrb[0].mxu0 %v39
    %v122 = vpop.f32.mrb[0].mxu0
    %v123 = vadd.f32 0.0, %v122
    %v124 = vpop.f32.mrb[0].mxu0
    %125 = vdwg.mxu0
    %v126 = vld [vmem:[%s2] sm:$0xff]
    %128 = vset.pattern.permute.xlu0 0
    %129 = vperm.xlu0 %128, %v126
    %v130 = vpop.permute.xlu0 %129
    %v132 = vmul.f32 %v123, %v130
    %v133 = vld [vmem:[%s3] sm:$0x1]
    %v135 = vlaneseq
    %v136 = vshrl.u32 %v135, 7
    %v137 = vsub.s32 0, %v136
    %v138 = vrot.slane %v133, %v137
    %v140 = vmul.f32 %v132, %v138
    %v141 = vmax.f32 %v140, 0.0005
    %v142 = vmin.f32 %v141, 0.9995
    %v143 = vsub.f32 1.0, %v142
    %v144 = vlog2.pop %v143
    %v145 = vmul.f32 %v144, 0.6931472
    %v146 = vsub.f32 0.0, %v145
    %v147 = vld [vmem:[#allocation5] sm:$0xff]
    %v148 = vadd.f32 %v147, %v146
    %149 = vst [vmem:[#allocation5] sm:$0xff] %v148
    // Predicated region
    $region26: #{tpu_custom_call.1} parent=1 // pred_check
      _
    $region27: #{tpu_custom_call.1} parent=1 // pred_check_branch
      %151 = sbr.rel (0) target = $region29
    $region28: #{tpu_custom_call.1} parent=1 // pred_region
      %s153 = ssub.s32 128, 128
      %154 = vsyncadd [#allocation4], %s153
      %s156 = sshll.u32 [#allocation5], 4
      %s157 = int_to_ptr.vmem [resolvable:$true] %s156
      %159 = dma.vmem_to_hbm [thread:$0]  %s157, 128, %s4, [#allocation4]
    $region29: #{tpu_custom_call.1} parent=1 // pred_fallthru
      _
    // Predicated region
    $region30: #{tpu_custom_call.1} parent=1 // pred_check
      _
    $region31: #{tpu_custom_call.1} parent=1 // pred_check_branch
      %161 = sbr.rel (0) target = $region33
    $region32: #{tpu_custom_call.1} parent=1 // pred_region
      %162 = dma.done [#allocation4], 128
    $region33: #{tpu_custom_call.1} parent=1 // pred_fallthru
      _
    %163 = vsyncpa [#allocation3], 1
    %164 = vsyncpa [#allocation4], 1

</llo_original>
